<compile_context>
chip_gen: v7x
topology: tpu7x:2x2x1
jax: 0.10.0
libtpu: 0.0.40
codegen_flags: <defaults>
</compile_context>

<pallas_src>
import jax
import jax.numpy as jnp
import numpy as np
from jax.experimental import pallas as pl
from jax.experimental.pallas import tpu as pltpu


def _round_up(v, m):
    return ((v + m - 1) // m) * m


def _gcn_kernel(a_ref, xw_ref, p_ref, out_ref, acc_ref):
    k = pl.program_id(1)      # reduction tile over source nodes
    nk = pl.num_programs(1)

    # Zero the per-row-tile accumulator at the start of every reduction sweep.
    @pl.when(k == 0)
    def _():
        acc_ref[...] = jnp.zeros_like(acc_ref)

    # acc += A_hat[i-tile, k-tile] @ XW[k-tile] : [TM, TK] @ [TK, C_pad]  (N^2 stream)
    acc_ref[...] += jnp.dot(
        a_ref[...], xw_ref[...], preferred_element_type=jnp.float32
    )

    # Last reduction step: fold this row tile into this i's pooled partial with the
    # (G_pad, TM) slice of the mean-pool matrix.  Output block is per-i, written once.
    @pl.when(k == nk - 1)
    def _():
        out_ref[...] = jnp.dot(
            p_ref[...], acc_ref[...], preferred_element_type=jnp.float32
        )


def gcn_forward_pallas(x, w, a_hat, pool, *, tile=None):
    """Returns P @ (A_hat @ (X @ W)) via a tiled Pallas TPU kernel.

    Bias is intentionally NOT applied here (hoisted to the caller; mean-pool rows sum
    to 1 for non-empty graphs, so P @ (H + b) == P @ H + b).
    """
    n, f = x.shape
    c = w.shape[1]
    g = pool.shape[0]

    # Generation-aware VMEM budget / tile cap.
    try:
        vmem_cap = int(pltpu.get_tpu_info().vmem_capacity_bytes)
    except Exception:  # pragma: no cover - interpret mode / unknown chip
        vmem_cap = 64 << 20
    max_tile = 2048 if vmem_cap <= (64 << 20) else 4096   # v7x: 64 MiB; v5e/v6e: 128 MiB
    if tile is None:
        tile = max_tile
    tile = min(tile, max_tile)

    # Tile / pad sizes: lane-dense channels (128), sublane-dense pool rows (8),
    # node axis padded to the tile size.
    c_pad = _round_up(max(c, 1), 128)
    g_pad = _round_up(max(g, 1), 8)
    if n <= tile:
        n_pad = _round_up(max(n, 1), 128)
        tm = tk = n_pad
    else:
        n_pad = _round_up(n, tile)
        tm = tk = tile

    # Precompute XW = X @ W in f32 (tiny), stream it as bf16 alongside the dominant
    # bf16 N^2 A_hat stream; all in-kernel dots accumulate in f32.
    xw = x.astype(jnp.float32) @ w.astype(jnp.float32)
    xw_p = jnp.zeros((n_pad, c_pad), jnp.bfloat16).at[:n, :c].set(
        xw.astype(jnp.bfloat16)
    )
    a_p = jnp.zeros((n_pad, n_pad), jnp.bfloat16).at[:n, :n].set(
        a_hat.astype(jnp.bfloat16)
    )
    p_p = jnp.zeros((g_pad, n_pad), jnp.float32).at[:g, :n].set(
        pool.astype(jnp.float32)
    )

    ni = n_pad // tm
    nk = n_pad // tk
    grid = (ni, nk)

    # Scoped-VMEM budget: double-buffered A / XW / P / out + f32 accumulator + headroom.
    need = (
        2 * tm * tk * 2        # A_hat bf16, double-buffered
        + 2 * tk * c_pad * 2   # XW bf16, double-buffered
        + 2 * g_pad * tm * 4   # pool matrix f32, double-buffered
        + 2 * g_pad * c_pad * 4  # output f32, double-buffered
        + tm * c_pad * 4       # accumulator scratch
    )
    vmem_limit = int(min(vmem_cap, max(16 << 20, need + (8 << 20))))

    out = pl.pallas_call(
        _gcn_kernel,
        out_shape=jax.ShapeDtypeStruct((ni, g_pad, c_pad), jnp.float32),
        grid_spec=pltpu.PrefetchScalarGridSpec(
            num_scalar_prefetch=0,
            grid=grid,
            in_specs=[
                pl.BlockSpec((tm, tk), lambda i, k: (i, k)),       # A_hat
                pl.BlockSpec((tk, c_pad), lambda i, k: (k, 0)),    # XW
                pl.BlockSpec((g_pad, tm), lambda i, k: (0, i)),    # mean-pool matrix
            ],
            out_specs=pl.BlockSpec((None, g_pad, c_pad), lambda i, k: (i, 0, 0)),
            scratch_shapes=[pltpu.VMEM((tm, c_pad), jnp.float32)],
        ),
        compiler_params=pltpu.CompilerParams(
            # i-axis output blocks are independent -> megacore-shardable on v7x;
            # k is the reduction axis (accumulator revisited) -> arbitrary.
            dimension_semantics=("parallel", "arbitrary"),
            vmem_limit_bytes=vmem_limit,
        ),
    )(a_p, xw_p, p_p)

    # Tiny (ni, G, C) partial reduction + unpad in plain XLA.
    return jnp.sum(out, axis=0)[:g, :c]


def build_normalized_adjacency(edge_index, edge_weights, num_nodes):
    """Dense A_hat = D^{-1/2} (A + I) D^{-1/2}, matching PyG gcn_norm with
    add_remaining_self_loops (existing self-loop edges keep their weights and duplicates
    are summed, as in PyG's scatter-add; missing self-loops get fill_value=1),
    improved=False, flow='source_to_target'."""
    src = edge_index[0].astype(jnp.int32)
    dst = edge_index[1].astype(jnp.int32)
    ew = edge_weights.astype(jnp.float32)
    is_loop = src == dst

    # Scatter-add all edges (messages flow source -> target): A[dst, src] += w.
    # Duplicate edges (incl. duplicate self-loops) sum, matching PyG aggregation.
    a = jnp.zeros((num_nodes, num_nodes), jnp.float32).at[dst, src].add(ew)

    # Remaining self-loops: nodes without any self-loop edge get a weight-1 loop.
    has_loop = jnp.zeros((num_nodes,), jnp.bool_).at[
        jnp.where(is_loop, src, num_nodes)
    ].set(True, mode="drop")
    a = a + jnp.diag(jnp.where(has_loop, 0.0, 1.0))

    deg = a.sum(axis=1)                                   # in-degree incl. self-loop
    dinv = jnp.where(deg > 0.0, jax.lax.rsqrt(deg), 0.0)
    return dinv[:, None] * a * dinv[None, :]


def build_mean_pool_matrix(batch, num_graphs, num_nodes):
    """P[g, i] = 1/|graph g| if batch[i] == g else 0  (global_mean_pool)."""
    one_hot = (batch[None, :] == jnp.arange(num_graphs)[:, None]).astype(jnp.float32)
    counts = jnp.maximum(one_hot.sum(axis=1, keepdims=True), 1.0)
    return one_hot / counts


def simplest_gcn(x, edge_index, edge_weights, batch, w, b, num_classes, num_graphs):
    # TODO(synk): dense A_hat is O(N^2) in HBM; very large sparse graphs would need a
    # segment/gather-based aggregation kernel instead of materializing A_hat.
    n = x.shape[0]
    a_hat = build_normalized_adjacency(edge_index, edge_weights, n)
    pool = build_mean_pool_matrix(batch, num_graphs, n)
    pooled = gcn_forward_pallas(x, w, a_hat, pool)
    # Bias hoisted out of the kernel (mean-pool rows sum to 1); mask empty graphs so
    # they stay 0 instead of becoming b.
    non_empty = (pool.sum(axis=1) > 0.0).astype(jnp.float32)[:, None]
    out = pooled + b[None, :].astype(jnp.float32) * non_empty
    if num_classes == 1:
        return out.reshape(-1)  # torch .view(-1)
    return out


def _reference(x, edge_index, edge_weights, batch, w, b, num_classes, num_graphs):
    n = x.shape[0]
    a_hat = build_normalized_adjacency(edge_index, edge_weights, n)
    pool = build_mean_pool_matrix(batch, num_graphs, n)
    out = pool @ (a_hat @ (x @ w) + b[None, :])
    return out.reshape(-1) if num_classes == 1 else out


if __name__ == "__main__":
    key = jax.random.PRNGKey(0)

    num_node_features = 8
    num_classes = 4
    num_graphs = 2

    def make_inputs(k, num_nodes, num_edges):
        k_x, k_src, k_dst, k_ew = jax.random.split(k, 4)
        x = jax.random.normal(k_x, (num_nodes, num_node_features), jnp.float32)
        src = jax.random.randint(k_src, (num_edges,), 0, num_nodes, jnp.int32)
        dst = jax.random.randint(k_dst, (num_edges,), 0, num_nodes, jnp.int32)
        edge_index = jnp.stack([src, dst], axis=0)
        edge_weights = jax.random.uniform(
            k_ew, (num_edges,), jnp.float32, minval=0.1, maxval=1.0
        )
        half = num_nodes // 2
        batch = jnp.concatenate(
            [jnp.zeros(half, jnp.int32), jnp.ones(num_nodes - half, jnp.int32)]
        )
        return x, edge_index, edge_weights, batch

    # GCNConv params: glorot-style weight [F, C]; non-zero bias to exercise the
    # hoisted-bias path (PyG inits bias to zero, but the math is identical).
    k_w, k_b, k_g1, k_g2 = jax.random.split(key, 4)
    limit = (6.0 / (num_node_features + num_classes)) ** 0.5
    w = jax.random.uniform(
        k_w, (num_node_features, num_classes), jnp.float32, minval=-limit, maxval=limit
    )
    b = jax.random.uniform(k_b, (num_classes,), jnp.float32, minval=-0.1, maxval=0.1)

    # Small graph: 16 nodes, 32 edges, 2 graphs (single-tile grid).
    x, ei, ew, batch = make_inputs(k_g1, num_nodes=16, num_edges=32)
    out = simplest_gcn(x, ei, ew, batch, w, b, num_classes, num_graphs)
    jax.block_until_ready(out)
    assert out.shape == (num_graphs, num_classes)
    ref = _reference(x, ei, ew, batch, w, b, num_classes, num_graphs)
    np.testing.assert_allclose(np.asarray(out), np.asarray(ref), rtol=5e-2, atol=2e-2)

    # Larger graph to exercise the multi-tile grid + accumulator + fused-pool path
    # (and the per-i output partials that make the i axis megacore-shardable).
    x2, ei2, ew2, batch2 = make_inputs(k_g2, num_nodes=200, num_edges=600)
    a_hat2 = build_normalized_adjacency(ei2, ew2, 200)
    pool2 = build_mean_pool_matrix(batch2, num_graphs, 200)
    out2 = gcn_forward_pallas(x2, w, a_hat2, pool2, tile=128) + b[None, :]  # grid=(2,2)
    jax.block_until_ready(out2)
    ref2 = pool2 @ (a_hat2 @ (x2 @ w) + b[None, :])
    np.testing.assert_allclose(np.asarray(out2), np.asarray(ref2), rtol=5e-2, atol=2e-2)

    print("KERNEL_OK")
</pallas_src>

<mosaic_0001>
module attributes {stable_mosaic.version = 11 : i64} {
  func.func @_gcn_kernel(%arg0: i32, %arg1: i32, %arg2: memref<128x128xbf16, #tpu.memory_space<vmem>>, %arg3: memref<128x128xbf16, #tpu.memory_space<vmem>>, %arg4: memref<8x128xf32, #tpu.memory_space<vmem>>, %arg5: memref<1x8x128xf32, #tpu.memory_space<vmem>>, %arg6: memref<128x128xf32, #tpu.memory_space<vmem>>) attributes {dimension_semantics = [#tpu.dimension_semantics<parallel>, #tpu.dimension_semantics<arbitrary>], iteration_bounds = array<i64: 1, 1>, scalar_prefetch = 0 : i64, scratch_operands = 1 : i64, tpu.core_type = #tpu.core_type<tc>, window_params = [{transform_indices = @transform_0, window_bounds = array<i64: 128, 128>}, {transform_indices = @transform_1, window_bounds = array<i64: 128, 128>}, {transform_indices = @transform_2, window_bounds = array<i64: 8, 128>}, {transform_indices = @transform_3, window_bounds = array<i64: 1, 8, 128>}]} {
    %c0_i32 = arith.constant 0 : i32
    %0 = arith.cmpi eq, %arg1, %c0_i32 : i32
    %1 = arith.extui %0 : i1 to i32
    %c0_i32_0 = arith.constant 0 : i32
    %2 = arith.cmpi ne, %1, %c0_i32_0 : i32
    scf.if %2 {
      %cst_10 = arith.constant 0.000000e+00 : f32
      %12 = vector.broadcast %cst_10 : f32 to vector<128x128xf32>
      %c0_11 = arith.constant 0 : index
      %c0_12 = arith.constant 0 : index
      %13 = vector.load %arg6[%c0_11, %c0_12] : memref<128x128xf32, #tpu.memory_space<vmem>>, vector<128x128xf32>
      tpu.vector_store %arg6[%c0_11, %c0_12], %12 {strides = array<i32>} : memref<128x128xf32, #tpu.memory_space<vmem>>, vector<128x128xf32>,
    } else {
    }
    %c0 = arith.constant 0 : index
    %c0_1 = arith.constant 0 : index
    %3 = vector.load %arg6[%c0, %c0_1] : memref<128x128xf32, #tpu.memory_space<vmem>>, vector<128x128xf32>
    %c0_2 = arith.constant 0 : index
    %c0_3 = arith.constant 0 : index
    %4 = vector.load %arg2[%c0_2, %c0_3] : memref<128x128xbf16, #tpu.memory_space<vmem>>, vector<128x128xbf16>
    %c0_4 = arith.constant 0 : index
    %c0_5 = arith.constant 0 : index
    %5 = vector.load %arg3[%c0_4, %c0_5] : memref<128x128xbf16, #tpu.memory_space<vmem>>, vector<128x128xbf16>
    %cst = arith.constant dense<0.000000e+00> : vector<128x128xf32>
    %6 = tpu.matmul %4, %5, %cst {dimension_numbers = #tpu.dot_dimension_numbers<[1], [0], [0], [1], [0, 0, 1, 1], [], []>} : vector<128x128xbf16>, vector<128x128xbf16>, vector<128x128xf32> -> vector<128x128xf32>
    %7 = arith.addf %3, %6 : vector<128x128xf32>
    %c0_6 = arith.constant 0 : index
    %c0_7 = arith.constant 0 : index
    %8 = vector.load %arg6[%c0_6, %c0_7] : memref<128x128xf32, #tpu.memory_space<vmem>>, vector<128x128xf32>
    tpu.vector_store %arg6[%c0_6, %c0_7], %7 {strides = array<i32>} : memref<128x128xf32, #tpu.memory_space<vmem>>, vector<128x128xf32>,
    %c0_i32_8 = arith.constant 0 : i32
    %9 = arith.cmpi eq, %arg1, %c0_i32_8 : i32
    %10 = arith.extui %9 : i1 to i32
    %c0_i32_9 = arith.constant 0 : i32
    %11 = arith.cmpi ne, %10, %c0_i32_9 : i32
    scf.if %11 {
      %c0_10 = arith.constant 0 : index
      %c0_11 = arith.constant 0 : index
      %12 = vector.load %arg4[%c0_10, %c0_11] : memref<8x128xf32, #tpu.memory_space<vmem>>, vector<8x128xf32>
      %c0_12 = arith.constant 0 : index
      %c0_13 = arith.constant 0 : index
      %13 = vector.load %arg6[%c0_12, %c0_13] : memref<128x128xf32, #tpu.memory_space<vmem>>, vector<128x128xf32>
      %cst_14 = arith.constant dense<0.000000e+00> : vector<8x128xf32>
      %14 = tpu.matmul %12, %13, %cst_14 {dimension_numbers = #tpu.dot_dimension_numbers<[1], [0], [0], [1], [0, 0, 1, 1], [], []>} : vector<8x128xf32>, vector<128x128xf32>, vector<8x128xf32> -> vector<8x128xf32>
      %c0_15 = arith.constant 0 : index
      %c0_16 = arith.constant 0 : index
      %c0_17 = arith.constant 0 : index
      %15 = vector.load %arg5[%c0_15, %c0_16, %c0_17] : memref<1x8x128xf32, #tpu.memory_space<vmem>>, vector<1x8x128xf32>
      %16 = vector.shape_cast %15 : vector<1x8x128xf32> to vector<8x128xf32>
      %17 = vector.shape_cast %14 : vector<8x128xf32> to vector<1x8x128xf32>
      tpu.vector_store %arg5[%c0_15, %c0_16, %c0_17], %17 {strides = array<i32>} : memref<1x8x128xf32, #tpu.memory_space<vmem>>, vector<1x8x128xf32>,
    } else {
    }
    return
  }
  func.func @transform_0(%arg0: i32, %arg1: i32) -> (i32, i32) {
    %c0_i32 = arith.constant 0 : i32
    return %arg0, %arg1 : i32, i32
  }
  func.func @transform_1(%arg0: i32, %arg1: i32) -> (i32, i32) {
    %c0_i32 = arith.constant 0 : i32
    %c0_i32_0 = arith.constant 0 : i32
    return %arg1, %c0_i32 : i32, i32
  }
  func.func @transform_2(%arg0: i32, %arg1: i32) -> (i32, i32) {
    %c0_i32 = arith.constant 0 : i32
    %c0_i32_0 = arith.constant 0 : i32
    return %c0_i32, %arg0 : i32, i32
  }
  func.func @transform_3(%arg0: i32, %arg1: i32) -> (i32, i32, i32) {
    %c0_i32 = arith.constant 0 : i32
    %c0_i32_0 = arith.constant 0 : i32
    %c0_i32_1 = arith.constant 0 : i32
    return %arg0, %c0_i32, %c0_i32_0 : i32, i32, i32
  }
}

</mosaic_0001>

<llo_original>
// kernel: tpu_custom_call.1
$region0: #{tpu_custom_call.1}
  #allocation0 [shape = 'u32[]', space=smem, size = 0x4, offset = 0x4, fixed_abs, tag = 'smem constant byte address 0x4 - core index']
  #allocation1 [shape = 'u32[144,128]{1,0:T(1,128)}', space=vmem, size = 0x12000, scoped, tag = 'internal scratch']
  #allocation2 [shape = 'f32[128,128]{1,0:T(8,128)}', space=vmem, size = 0x10000, scoped, tag = 'scratch operand']
  %s0 = inlined_call_operand.hbm [shape: bf16[128,128], index: 0, kind: input, shape index: {}]
  %s1 = inlined_call_operand.hbm [shape: bf16[128,128], index: 1, kind: input, shape index: {}]
  %s2 = inlined_call_operand.hbm [shape: f32[8,128], index: 2, kind: input, shape index: {}]
  %s3 = inlined_call_operand.hbm [shape: f32[1,8,128], index: 3, kind: output, shape index: {}]
  %s4 = sld [smem:[#allocation0]]
  $region42: #{tpu_custom_call.1} parent=0
    _
  %s6 = ssub.s32 1, %s4
  %s7 = scalar_select 0, %s6, %s4
  $region1: #{tpu_custom_call.1} parent=0
    #allocation3 [shape = 'u8[32768]{0}', space=vmem, size = 0x8000, scoped, tag = 'input window, operand 0, single buffered']
    #allocation4 [shape = 's32[1]{0}', space=sflag, size = 0x4, scoped, tag = 'scoped memory for tpu_custom_call.1']
    #allocation5 [shape = 's32[1]{0}', space=sflag, size = 0x4, scoped, tag = 'scoped memory for tpu_custom_call.1']
    #allocation6 [shape = 'u8[32768]{0}', space=vmem, size = 0x8000, scoped, tag = 'input window, operand 1, single buffered']
    #allocation7 [shape = 's32[1]{0}', space=sflag, size = 0x4, scoped, tag = 'scoped memory for tpu_custom_call.1']
    #allocation8 [shape = 'u8[4096]{0}', space=vmem, size = 0x1000, scoped, tag = 'input window, operand 2, single buffered']
    #allocation9 [shape = 'u8[4096]{0}', space=vmem, size = 0x1000, scoped, tag = 'output window, operand 0, single buffered']
    %8 = vsyncpa [#allocation4], 0
    %9 = vsyncpa [#allocation7], 0
    %10 = vsyncpa [#allocation5], 0
    // Predicated region
    $region2: #{tpu_custom_call.1} parent=1 // pred_check
      _
    $region3: #{tpu_custom_call.1} parent=1 // pred_check_branch
      %12 = sbr.rel (0) target = $region5
    $region4: #{tpu_custom_call.1} parent=1 // pred_region
      %s14 = ssub.s32 1024, 1024
      %15 = vsyncadd [#allocation4], %s14
      %s16 = sshll.u32 [#allocation3], 4
      %s17 = int_to_ptr.vmem [resolvable:$true] %s16
      %22 = dma.hbm_to_vmem [thread:$0]  %s0, 1024, %s17, [#allocation4], 64, 64, 4
    $region5: #{tpu_custom_call.1} parent=1 // pred_fallthru
      _
    // Predicated region
    $region6: #{tpu_custom_call.1} parent=1 // pred_check
      _
    $region7: #{tpu_custom_call.1} parent=1 // pred_check_branch
      %24 = sbr.rel (0) target = $region9
    $region8: #{tpu_custom_call.1} parent=1 // pred_region
      %s26 = ssub.s32 1024, 1024
      %27 = vsyncadd [#allocation7], %s26
      %s28 = sshll.u32 [#allocation6], 4
      %s29 = int_to_ptr.vmem [resolvable:$true] %s28
      %34 = dma.hbm_to_vmem [thread:$0]  %s1, 1024, %s29, [#allocation7], 64, 64, 4
    $region9: #{tpu_custom_call.1} parent=1 // pred_fallthru
      _
    // Predicated region
    $region10: #{tpu_custom_call.1} parent=1 // pred_check
      _
    $region11: #{tpu_custom_call.1} parent=1 // pred_check_branch
      %36 = sbr.rel (0) target = $region13
    $region12: #{tpu_custom_call.1} parent=1 // pred_region
      %s38 = ssub.s32 128, 128
      %39 = vsyncadd [#allocation7], %s38
      %s41 = sshll.u32 [#allocation8], 4
      %s42 = int_to_ptr.vmem [resolvable:$true] %s41
      %44 = dma.hbm_to_vmem [thread:$0]  %s2, 128, %s42, [#allocation7]
    $region13: #{tpu_custom_call.1} parent=1 // pred_fallthru
      _
    // Predicated region
    $region14: #{tpu_custom_call.1} parent=1 // pred_check
      _
    $region15: #{tpu_custom_call.1} parent=1 // pred_check_branch
      %46 = sbr.rel (0) target = $region17
    $region16: #{tpu_custom_call.1} parent=1 // pred_region
      %47 = dma.done [#allocation4], 1024
    $region17: #{tpu_custom_call.1} parent=1 // pred_fallthru
      _
    // Predicated region
    $region18: #{tpu_custom_call.1} parent=1 // pred_check
      _
    $region19: #{tpu_custom_call.1} parent=1 // pred_check_branch
      %49 = sbr.rel (0) target = $region21
    $region20: #{tpu_custom_call.1} parent=1 // pred_region
      %50 = dma.done [#allocation7], 1024
    $region21: #{tpu_custom_call.1} parent=1 // pred_fallthru
      _
    // Predicated region
    $region22: #{tpu_custom_call.1} parent=1 // pred_check
      _
    $region23: #{tpu_custom_call.1} parent=1 // pred_check_branch
      %52 = sbr.rel (0) target = $region25
    $region24: #{tpu_custom_call.1} parent=1 // pred_region
      %53 = dma.done [#allocation7], 128
    $region25: #{tpu_custom_call.1} parent=1 // pred_fallthru
      _
    %p55 = scmp.eq.s32.totalorder 0, 0
    // Predicated region
    $region26: #{tpu_custom_call.1} parent=1 // pred_check
      %p56 = pneg %p55
    $region27: #{tpu_custom_call.1} parent=1 // pred_check_branch
      %58 = sbr.rel (%p56) target = $region29
    $region28: #{tpu_custom_call.1} parent=1 // pred_region
      %59 = vst [vmem:[#allocation2] sm:$0xff] 0.0
      %60 = vst [vmem:[#allocation2 + $0x8] sm:$0xff] 0.0
      %61 = vst [vmem:[#allocation2 + $0x10] sm:$0xff] 0.0
      %62 = vst [vmem:[#allocation2 + $0x18] sm:$0xff] 0.0
      %63 = vst [vmem:[#allocation2 + $0x20] sm:$0xff] 0.0
      %64 = vst [vmem:[#allocation2 + $0x28] sm:$0xff] 0.0
      %65 = vst [vmem:[#allocation2 + $0x30] sm:$0xff] 0.0
      %66 = vst [vmem:[#allocation2 + $0x38] sm:$0xff] 0.0
      %67 = vst [vmem:[#allocation2 + $0x40] sm:$0xff] 0.0
      %68 = vst [vmem:[#allocation2 + $0x48] sm:$0xff] 0.0
      %69 = vst [vmem:[#allocation2 + $0x50] sm:$0xff] 0.0
      %70 = vst [vmem:[#allocation2 + $0x58] sm:$0xff] 0.0
      %71 = vst [vmem:[#allocation2 + $0x60] sm:$0xff] 0.0
      %72 = vst [vmem:[#allocation2 + $0x68] sm:$0xff] 0.0
      %73 = vst [vmem:[#allocation2 + $0x70] sm:$0xff] 0.0
      %74 = vst [vmem:[#allocation2 + $0x78] sm:$0xff] 0.0
    $region29: #{tpu_custom_call.1} parent=1 // pred_fallthru
      _
    %v75 = vld [vmem:[#allocation2] sm:$0xff]
    %v76 = vld [vmem:[#allocation2 + $0x8] sm:$0xff]
    %v77 = vld [vmem:[#allocation2 + $0x10] sm:$0xff]
    %v78 = vld [vmem:[#allocation2 + $0x18] sm:$0xff]
    %v79 = vld [vmem:[#allocation2 + $0x20] sm:$0xff]
    %v80 = vld [vmem:[#allocation2 + $0x28] sm:$0xff]
    %v81 = vld [vmem:[#allocation2 + $0x30] sm:$0xff]
    %v82 = vld [vmem:[#allocation2 + $0x38] sm:$0xff]
    %v83 = vld [vmem:[#allocation2 + $0x40] sm:$0xff]
    %v84 = vld [vmem:[#allocation2 + $0x48] sm:$0xff]
    %v85 = vld [vmem:[#allocation2 + $0x50] sm:$0xff]
    %v86 = vld [vmem:[#allocation2 + $0x58] sm:$0xff]
    %v87 = vld [vmem:[#allocation2 + $0x60] sm:$0xff]
    %v88 = vld [vmem:[#allocation2 + $0x68] sm:$0xff]
    %v89 = vld [vmem:[#allocation2 + $0x70] sm:$0xff]
    %v90 = vld [vmem:[#allocation2 + $0x78] sm:$0xff]
    %v91 = vld [vmem:[#allocation3] sm:$0xf]
    %v92 = vld [vmem:[#allocation3 + $0x4] sm:$0xf]
    %v93 = vld [vmem:[#allocation3 + $0x8] sm:$0xf]
    %v94 = vld [vmem:[#allocation3 + $0xc] sm:$0xf]
    %v95 = vld [vmem:[#allocation3 + $0x10] sm:$0xf]
    %v96 = vld [vmem:[#allocation3 + $0x14] sm:$0xf]
    %v97 = vld [vmem:[#allocation3 + $0x18] sm:$0xf]
    %v98 = vld [vmem:[#allocation3 + $0x1c] sm:$0xf]
    %v99 = vld [vmem:[#allocation3 + $0x20] sm:$0xf]
    %v100 = vld [vmem:[#allocation3 + $0x24] sm:$0xf]
    %v101 = vld [vmem:[#allocation3 + $0x28] sm:$0xf]
    %v102 = vld [vmem:[#allocation3 + $0x2c] sm:$0xf]
    %v103 = vld [vmem:[#allocation3 + $0x30] sm:$0xf]
    %v104 = vld [vmem:[#allocation3 + $0x34] sm:$0xf]
    %v105 = vld [vmem:[#allocation3 + $0x38] sm:$0xf]
    %v106 = vld [vmem:[#allocation3 + $0x3c] sm:$0xf]
    %v107 = vld [vmem:[#allocation6] sm:$0xf]
    %v108 = vld [vmem:[#allocation6 + $0x4] sm:$0xf]
    %v109 = vld [vmem:[#allocation6 + $0x8] sm:$0xf]
    %v110 = vld [vmem:[#allocation6 + $0xc] sm:$0xf]
    %v111 = vld [vmem:[#allocation6 + $0x10] sm:$0xf]
    %v112 = vld [vmem:[#allocation6 + $0x14] sm:$0xf]
    %v113 = vld [vmem:[#allocation6 + $0x18] sm:$0xf]
    %v114 = vld [vmem:[#allocation6 + $0x1c] sm:$0xf]
    %v115 = vld [vmem:[#allocation6 + $0x20] sm:$0xf]
    %v116 = vld [vmem:[#allocation6 + $0x24] sm:$0xf]
    %v117 = vld [vmem:[#allocation6 + $0x28] sm:$0xf]
    %v118 = vld [vmem:[#allocation6 + $0x2c] sm:$0xf]
    %v119 = vld [vmem:[#allocation6 + $0x30] sm:$0xf]
    %v120 = vld [vmem:[#allocation6 + $0x34] sm:$0xf]
    %v121 = vld [vmem:[#allocation6 + $0x38] sm:$0xf]
    %v122 = vld [vmem:[#allocation6 + $0x3c] sm:$0xf]
    %v139 = vunpack.c.l.b16 %v91
    %v140 = vunpack.c.l.b16 %v92
    %v141 = vunpack.c.l.b16 %v93
    %v142 = vunpack.c.l.b16 %v94
    %v143 = vunpack.c.l.b16 %v95
    %v144 = vunpack.c.l.b16 %v96
    %v145 = vunpack.c.l.b16 %v97
    %v146 = vunpack.c.l.b16 %v98
    %v147 = vunpack.c.l.b16 %v99
    %v148 = vunpack.c.l.b16 %v100
    %v149 = vunpack.c.l.b16 %v101
    %v150 = vunpack.c.l.b16 %v102
    %v151 = vunpack.c.l.b16 %v103
    %v152 = vunpack.c.l.b16 %v104
    %v153 = vunpack.c.l.b16 %v105
    %v154 = vunpack.c.l.b16 %v106
    %v155 = vpack.c.b16 %v140, %v139
    %v156 = vpack.c.b16 %v142, %v141
    %v157 = vpack.c.b16 %v144, %v143
    %v158 = vpack.c.b16 %v146, %v145
    %v159 = vpack.c.b16 %v148, %v147
    %v160 = vpack.c.b16 %v150, %v149
    %v161 = vpack.c.b16 %v152, %v151
    %v162 = vpack.c.b16 %v154, %v153
    %v187 = vunpack.c.l.b16 %v107
    %v188 = vunpack.c.l.b16 %v108
    %v189 = vunpack.c.l.b16 %v109
    %v190 = vunpack.c.l.b16 %v110
    %v191 = vunpack.c.l.b16 %v111
    %v192 = vunpack.c.l.b16 %v112
    %v193 = vunpack.c.l.b16 %v113
    %v194 = vunpack.c.l.b16 %v114
    %v195 = vunpack.c.l.b16 %v115
    %v196 = vunpack.c.l.b16 %v116
    %v197 = vunpack.c.l.b16 %v117
    %v198 = vunpack.c.l.b16 %v118
    %v199 = vunpack.c.l.b16 %v119
    %v200 = vunpack.c.l.b16 %v120
    %v201 = vunpack.c.l.b16 %v121
    %v202 = vunpack.c.l.b16 %v122
    %v203 = vpack.c.b16 %v188, %v187
    %v204 = vpack.c.b16 %v190, %v189
    %v205 = vpack.c.b16 %v192, %v191
    %v206 = vpack.c.b16 %v194, %v193
    %v207 = vpack.c.b16 %v196, %v195
    %v208 = vpack.c.b16 %v198, %v197
    %v209 = vpack.c.b16 %v200, %v199
    %v210 = vpack.c.b16 %v202, %v201
    %219 = vmatprep.subr.bf16.mxu0 0
    %220 = vmatpush1.bf16.msra.mxu0 %v203
    %221 = vmatprep.subr.bf16.mxu0 0
    %222 = vmatpush1.bf16.msra.mxu0 %v204
    %223 = vmatprep.subr.bf16.mxu0 0
    %224 = vmatpush1.bf16.msra.mxu0 %v205
    %225 = vmatprep.subr.bf16.mxu0 0
    %226 = vmatpush1.bf16.msra.mxu0 %v206
    %227 = vmatprep.subr.bf16.mxu0 0
    %228 = vmatpush1.bf16.msra.mxu0 %v207
    %229 = vmatprep.subr.bf16.mxu0 0
    %230 = vmatpush1.bf16.msra.mxu0 %v208
    %231 = vmatprep.subr.bf16.mxu0 0
    %232 = vmatpush1.bf16.msra.mxu0 %v209
    %233 = vmatprep.subr.bf16.mxu0 0
    %234 = vmatpush1.bf16.msra.mxu0 %v210
    %235 = vmatprep.subr.bf16.mxu0 0
    %236 = vmatpush1.bf16.msra.mxu0 0
    %237 = vmatprep.subr.bf16.mxu0 0
    %238 = vmatpush1.bf16.msra.mxu0 0
    %239 = vmatprep.subr.bf16.mxu0 0
    %240 = vmatpush1.bf16.msra.mxu0 0
    %241 = vmatprep.subr.bf16.mxu0 0
    %242 = vmatpush1.bf16.msra.mxu0 0
    %243 = vmatprep.subr.bf16.mxu0 0
    %244 = vmatpush1.bf16.msra.mxu0 0
    %245 = vmatprep.subr.bf16.mxu0 0
    %246 = vmatpush1.bf16.msra.mxu0 0
    %247 = vmatprep.subr.bf16.mxu0 0
    %248 = vmatpush1.bf16.msra.mxu0 0
    %249 = vmatprep.subr.bf16.mxu0 0
    %250 = vmatpush1.bf16.msra.mxu0 0
    %251 = vmatprep.mubr.bf16.mxu0 0
    %252 = vmatmul.mubr.bf16.gmra.mrb[0].mxu0 %v155
    %v253 = vpop.f32.mrb[0].mxu0
    %v254 = vadd.f32 0.0, %v253
    %v255 = vpop.f32.mrb[0].mxu0
    %v256 = vpop.f32.mrb[0].mxu0
    %v257 = vadd.f32 0.0, %v256
    %v258 = vpop.f32.mrb[0].mxu0
    %259 = vmatprep.mubr.bf16.mxu0 0
    %260 = vmatmul.mubr.bf16.gmra.mrb[0].mxu0 %v156
    %v261 = vpop.f32.mrb[0].mxu0
    %v262 = vadd.f32 0.0, %v261
    %v263 = vpop.f32.mrb[0].mxu0
    %v264 = vpop.f32.mrb[0].mxu0
    %v265 = vadd.f32 0.0, %v264
    %v266 = vpop.f32.mrb[0].mxu0
    %267 = vmatprep.mubr.bf16.mxu0 0
    %268 = vmatmul.mubr.bf16.gmra.mrb[0].mxu0 %v157
    %v269 = vpop.f32.mrb[0].mxu0
    %v270 = vadd.f32 0.0, %v269
    %v271 = vpop.f32.mrb[0].mxu0
    %v272 = vpop.f32.mrb[0].mxu0
    %v273 = vadd.f32 0.0, %v272
    %v274 = vpop.f32.mrb[0].mxu0
    %275 = vmatprep.mubr.bf16.mxu0 0
    %276 = vmatmul.mubr.bf16.gmra.mrb[0].mxu0 %v158
    %v277 = vpop.f32.mrb[0].mxu0
    %v278 = vadd.f32 0.0, %v277
    %v279 = vpop.f32.mrb[0].mxu0
    %v280 = vpop.f32.mrb[0].mxu0
    %v281 = vadd.f32 0.0, %v280
    %v282 = vpop.f32.mrb[0].mxu0
    %283 = vmatprep.mubr.bf16.mxu0 0
    %284 = vmatmul.mubr.bf16.gmra.mrb[0].mxu0 %v159
    %v285 = vpop.f32.mrb[0].mxu0
    %v286 = vadd.f32 0.0, %v285
    %v287 = vpop.f32.mrb[0].mxu0
    %v288 = vpop.f32.mrb[0].mxu0
    %v289 = vadd.f32 0.0, %v288
    %v290 = vpop.f32.mrb[0].mxu0
    %291 = vmatprep.mubr.bf16.mxu0 0
    %292 = vmatmul.mubr.bf16.gmra.mrb[0].mxu0 %v160
    %v293 = vpop.f32.mrb[0].mxu0
    %v294 = vadd.f32 0.0, %v293
    %v295 = vpop.f32.mrb[0].mxu0
    %v296 = vpop.f32.mrb[0].mxu0
    %v297 = vadd.f32 0.0, %v296
    %v298 = vpop.f32.mrb[0].mxu0
    %299 = vmatprep.mubr.bf16.mxu0 0
    %300 = vmatmul.mubr.bf16.gmra.mrb[0].mxu0 %v161
    %v301 = vpop.f32.mrb[0].mxu0
    %v302 = vadd.f32 0.0, %v301
    %v303 = vpop.f32.mrb[0].mxu0
    %v304 = vpop.f32.mrb[0].mxu0
    %v305 = vadd.f32 0.0, %v304
    %v306 = vpop.f32.mrb[0].mxu0
    %307 = vmatprep.mubr.bf16.mxu0 0
    %308 = vmatmul.mubr.bf16.gmra.mrb[0].mxu0 %v162
    %v309 = vpop.f32.mrb[0].mxu0
    %v310 = vadd.f32 0.0, %v309
    %v311 = vpop.f32.mrb[0].mxu0
    %v312 = vpop.f32.mrb[0].mxu0
    %v313 = vadd.f32 0.0, %v312
    %v314 = vpop.f32.mrb[0].mxu0
    %315 = vdwg.mxu0
    %v316 = vadd.f32 %v75, %v254
    %v317 = vadd.f32 %v76, %v257
    %v318 = vadd.f32 %v77, %v262
    %v319 = vadd.f32 %v78, %v265
    %v320 = vadd.f32 %v79, %v270
    %v321 = vadd.f32 %v80, %v273
    %v322 = vadd.f32 %v81, %v278
    %v323 = vadd.f32 %v82, %v281
    %v324 = vadd.f32 %v83, %v286
    %v325 = vadd.f32 %v84, %v289
    %v326 = vadd.f32 %v85, %v294
    %v327 = vadd.f32 %v86, %v297
    %v328 = vadd.f32 %v87, %v302
    %v329 = vadd.f32 %v88, %v305
    %v330 = vadd.f32 %v89, %v310
    %v331 = vadd.f32 %v90, %v313
    %332 = vst [vmem:[#allocation2] sm:$0xff] %v316
    %333 = vst [vmem:[#allocation2 + $0x8] sm:$0xff] %v317
    %334 = vst [vmem:[#allocation2 + $0x10] sm:$0xff] %v318
    %335 = vst [vmem:[#allocation2 + $0x18] sm:$0xff] %v319
    %336 = vst [vmem:[#allocation2 + $0x20] sm:$0xff] %v320
    %337 = vst [vmem:[#allocation2 + $0x28] sm:$0xff] %v321
    %338 = vst [vmem:[#allocation2 + $0x30] sm:$0xff] %v322
    %339 = vst [vmem:[#allocation2 + $0x38] sm:$0xff] %v323
    %340 = vst [vmem:[#allocation2 + $0x40] sm:$0xff] %v324
    %341 = vst [vmem:[#allocation2 + $0x48] sm:$0xff] %v325
    %342 = vst [vmem:[#allocation2 + $0x50] sm:$0xff] %v326
    %343 = vst [vmem:[#allocation2 + $0x58] sm:$0xff] %v327
    %344 = vst [vmem:[#allocation2 + $0x60] sm:$0xff] %v328
    %345 = vst [vmem:[#allocation2 + $0x68] sm:$0xff] %v329
    %346 = vst [vmem:[#allocation2 + $0x70] sm:$0xff] %v330
    %347 = vst [vmem:[#allocation2 + $0x78] sm:$0xff] %v331
    // Predicated region
    $region30: #{tpu_custom_call.1} parent=1 // pred_check
      %p348 = pneg %p55
    $region31: #{tpu_custom_call.1} parent=1 // pred_check_branch
      %350 = sbr.rel (%p348) target = $region33
    $region32: #{tpu_custom_call.1} parent=1 // pred_region
      %v351 = vld [vmem:[#allocation8] sm:$0xff]
      %v352 = vld [vmem:[#allocation2] sm:$0xff]
      %v353 = vld [vmem:[#allocation2 + $0x8] sm:$0xff]
      %v354 = vld [vmem:[#allocation2 + $0x10] sm:$0xff]
      %v355 = vld [vmem:[#allocation2 + $0x18] sm:$0xff]
      %v356 = vld [vmem:[#allocation2 + $0x20] sm:$0xff]
      %v357 = vld [vmem:[#allocation2 + $0x28] sm:$0xff]
      %v358 = vld [vmem:[#allocation2 + $0x30] sm:$0xff]
      %v359 = vld [vmem:[#allocation2 + $0x38] sm:$0xff]
      %v360 = vld [vmem:[#allocation2 + $0x40] sm:$0xff]
      %v361 = vld [vmem:[#allocation2 + $0x48] sm:$0xff]
      %v362 = vld [vmem:[#allocation2 + $0x50] sm:$0xff]
      %v363 = vld [vmem:[#allocation2 + $0x58] sm:$0xff]
      %v364 = vld [vmem:[#allocation2 + $0x60] sm:$0xff]
      %v365 = vld [vmem:[#allocation2 + $0x68] sm:$0xff]
      %v366 = vld [vmem:[#allocation2 + $0x70] sm:$0xff]
      %v367 = vld [vmem:[#allocation2 + $0x78] sm:$0xff]
      %368 = vmatprep.subr.mxu0 0.0
      %369 = vmatpush1.msra.mxu0 %v352
      %370 = vmatprep.subr.mxu0 0.0
      %371 = vmatpush1.msra.mxu0 %v353
      %372 = vmatprep.subr.mxu0 0.0
      %373 = vmatpush1.msra.mxu0 %v354
      %374 = vmatprep.subr.mxu0 0.0
      %375 = vmatpush1.msra.mxu0 %v355
      %376 = vmatprep.subr.mxu0 0.0
      %377 = vmatpush1.msra.mxu0 %v356
      %378 = vmatprep.subr.mxu0 0.0
      %379 = vmatpush1.msra.mxu0 %v357
      %380 = vmatprep.subr.mxu0 0.0
      %381 = vmatpush1.msra.mxu0 %v358
      %382 = vmatprep.subr.mxu0 0.0
      %383 = vmatpush1.msra.mxu0 %v359
      %384 = vmatprep.subr.mxu0 0.0
      %385 = vmatpush1.msra.mxu0 %v360
      %386 = vmatprep.subr.mxu0 0.0
      %387 = vmatpush1.msra.mxu0 %v361
      %388 = vmatprep.subr.mxu0 0.0
      %389 = vmatpush1.msra.mxu0 %v362
      %390 = vmatprep.subr.mxu0 0.0
      %391 = vmatpush1.msra.mxu0 %v363
      %392 = vmatprep.subr.mxu0 0.0
      %393 = vmatpush1.msra.mxu0 %v364
      %394 = vmatprep.subr.mxu0 0.0
      %395 = vmatpush1.msra.mxu0 %v365
      %396 = vmatprep.subr.mxu0 0.0
      %397 = vmatpush1.msra.mxu0 %v366
      %398 = vmatprep.subr.mxu0 0.0
      %399 = vmatpush1.msra.mxu0 %v367
      %400 = vmatprep.subr.mxu0 0.0
      %401 = vmatpush1.msra.mxu0 0.0
      %402 = vmatprep.subr.mxu0 0.0
      %403 = vmatpush1.msra.mxu0 0.0
      %404 = vmatprep.subr.mxu0 0.0
      %405 = vmatpush1.msra.mxu0 0.0
      %406 = vmatprep.subr.mxu0 0.0
      %407 = vmatpush1.msra.mxu0 0.0
      %408 = vmatprep.subr.mxu0 0.0
      %409 = vmatpush1.msra.mxu0 0.0
      %410 = vmatprep.subr.mxu0 0.0
      %411 = vmatpush1.msra.mxu0 0.0
      %412 = vmatprep.subr.mxu0 0.0
      %413 = vmatpush1.msra.mxu0 0.0
      %414 = vmatprep.subr.mxu0 0.0
      %415 = vmatpush1.msra.mxu0 0.0
      %416 = vmatprep.subr.mxu0 0.0
      %417 = vmatpush1.msra.mxu0 0.0
      %418 = vmatprep.subr.mxu0 0.0
      %419 = vmatpush1.msra.mxu0 0.0
      %420 = vmatprep.subr.mxu0 0.0
      %421 = vmatpush1.msra.mxu0 0.0
      %422 = vmatprep.subr.mxu0 0.0
      %423 = vmatpush1.msra.mxu0 0.0
      %424 = vmatprep.subr.mxu0 0.0
      %425 = vmatpush1.msra.mxu0 0.0
      %426 = vmatprep.subr.mxu0 0.0
      %427 = vmatpush1.msra.mxu0 0.0
      %428 = vmatprep.subr.mxu0 0.0
      %429 = vmatpush1.msra.mxu0 0.0
      %430 = vmatprep.subr.mxu0 0.0
      %431 = vmatpush1.msra.mxu0 0.0
      %432 = vmatprep.mubr.f32.mxu0 0.0
      %433 = vmatmul.mubr.f32.gmra.mrb[0].mxu0 %v351
      %v434 = vpop.f32.mrb[0].mxu0
      %v435 = vadd.f32 0.0, %v434
      %v436 = vpop.f32.mrb[0].mxu0
      %437 = vdwg.mxu0
      %438 = vst [vmem:[#allocation9] sm:$0xff] %v435
    $region33: #{tpu_custom_call.1} parent=1 // pred_fallthru
      _
    // Predicated region
    $region34: #{tpu_custom_call.1} parent=1 // pred_check
      _
    $region35: #{tpu_custom_call.1} parent=1 // pred_check_branch
      %440 = sbr.rel (0) target = $region37
    $region36: #{tpu_custom_call.1} parent=1 // pred_region
      %s442 = ssub.s32 128, 128
      %443 = vsyncadd [#allocation5], %s442
      %s445 = sshll.u32 [#allocation9], 4
      %s446 = int_to_ptr.vmem [resolvable:$true] %s445
      %448 = dma.vmem_to_hbm [thread:$0]  %s446, 128, %s3, [#allocation5]
    $region37: #{tpu_custom_call.1} parent=1 // pred_fallthru
      _
    // Predicated region
    $region38: #{tpu_custom_call.1} parent=1 // pred_check
      _
    $region39: #{tpu_custom_call.1} parent=1 // pred_check_branch
      %450 = sbr.rel (0) target = $region41
    $region40: #{tpu_custom_call.1} parent=1 // pred_region
      %451 = dma.done [#allocation5], 128
    $region41: #{tpu_custom_call.1} parent=1 // pred_fallthru
      _
    %452 = vsyncpa [#allocation4], 1
    %453 = vsyncpa [#allocation7], 1
    %454 = vsyncpa [#allocation5], 1

</llo_original>
